<compile_context>
chip_gen: v7x
topology: tpu7x:2x2x1
jax: 0.10.0
libtpu: 0.0.40
codegen_flags: <defaults>
</compile_context>

<pallas_src>
import math
import jax
import jax.numpy as jnp
from jax.experimental import pallas as pl
from jax.experimental.pallas import tpu as pltpu


def _jscc_kernel(idx_ref, x_ref, wcat_ref, o_ref):
    # idx_ref : (1, Lt)       int32 -- per-token rate index, lane-dense
    # x_ref   : (Cin+1, Lt)   bf16  -- input channels + trailing ones row
    # wcat_ref: (R*C, Cin+1)  bf16  -- wcat[r*C:(r+1)*C] = [weight[r].T | bias[r]+token[r]]
    # o_ref   : (C, Lt)       f32
    C = o_ref.shape[0]
    R = wcat_ref.shape[0] // C
    idx = idx_ref[...]                                  # (1, Lt)

    # One wide MXU push per tile: (R*C, Cin+1) @ (Cin+1, Lt) -> (R*C, Lt), f32 acc.
    # bias + rate_token ride along via the ones row / trailing wcat column.
    y_all = jnp.dot(wcat_ref[...], x_ref[...], preferred_element_type=jnp.float32)

    # Per-lane rate select; idx broadcasts over sublanes (cheap).
    acc = y_all[0:C, :]
    for r in range(1, R):
        acc = jnp.where(idx == r, y_all[r * C:(r + 1) * C, :], acc)
    o_ref[...] = acc.astype(o_ref.dtype)


def _pick_lane_tile(L, max_tile=512):
    """Largest multiple of 128 dividing L, capped at max_tile; else full L."""
    t = max_tile
    while t >= 128:
        if L % t == 0:
            return t
        t -= 128
    return L


def jscc_decoder_forward(x_nchw, indexes, params, *, compute_dtype=jnp.bfloat16):
    """x_nchw: (B, Cin, H, W), indexes: (B*H*W,) int32 in [0, rate_num)."""
    B, Cin, H, W = x_nchw.shape
    L = H * W
    weight = params["weight"]          # (R, Cin, C)
    bias = params["bias"]              # (R, C)
    rate_token = params["rate_token"]  # (R, C)
    R, _, C = weight.shape
    out_dtype = x_nchw.dtype

    # NCHW-native: free reshape, tokens on lanes.  Append ones row so bias+token
    # fold into the matmul; the astype fuses with the concat in the wrapper.
    x_bcl = x_nchw.reshape(B, Cin, L)
    ones = jnp.ones((B, 1, L), x_bcl.dtype)
    x_aug = jnp.concatenate([x_bcl, ones], axis=1).astype(compute_dtype)  # (B, Cin+1, L)
    Ck = Cin + 1

    idx = indexes.reshape(B, 1, L).astype(jnp.int32)                      # (B, 1, L)

    # Tiny parameter table: transposed weights with (bias + rate_token) as the
    # trailing column, concatenated over rates.
    w_t = jnp.transpose(weight, (0, 2, 1))                                # (R, C, Cin)
    bt = (bias + rate_token)[..., None]                                   # (R, C, 1)
    wcat = jnp.concatenate([w_t, bt], axis=-1).reshape(R * C, Ck)
    wcat = wcat.astype(compute_dtype)                                     # (R*C, Cin+1)

    lt = _pick_lane_tile(L)
    grid = (B, L // lt)

    out_bcl = pl.pallas_call(
        _jscc_kernel,
        out_shape=jax.ShapeDtypeStruct((B, C, L), out_dtype),
        grid=grid,
        in_specs=[
            pl.BlockSpec((None, 1, lt), lambda b, t: (b, 0, t)),          # idx
            pl.BlockSpec((None, Ck, lt), lambda b, t: (b, 0, t)),         # x (+ones row)
            pl.BlockSpec((R * C, Ck), lambda b, t: (0, 0)),               # wcat (resident)
        ],
        out_specs=pl.BlockSpec((None, C, lt), lambda b, t: (b, 0, t)),
        compiler_params=pltpu.CompilerParams(
            dimension_semantics=("parallel", "parallel")),
    )(idx, x_aug, wcat)

    # TODO(synk): self.layers (BasicLayerDec) not provided -> identity.

    return out_bcl.reshape(B, C, H, W)      # pure reshape, no transpose


def init_params(key, embed_dim, rate_choice):
    """Deterministic synthetic init mirroring the module's parameter shapes."""
    R = len(rate_choice)
    max_rate = max(rate_choice)
    k_w, k_b, k_t = jax.random.split(key, 3)
    # kaiming_normal_(a=sqrt(5)) on (R, max_rate, C): fan_in = max_rate * C
    gain = math.sqrt(2.0 / (1.0 + 5.0))
    std_w = gain / math.sqrt(max_rate * embed_dim)
    weight = std_w * jax.random.normal(k_w, (R, max_rate, embed_dim), jnp.float32)
    # The PyTorch module literally uses bound = 1/sqrt(rate_num).
    bound = 1.0 / math.sqrt(R)
    bias = jax.random.uniform(k_b, (R, embed_dim), jnp.float32, -bound, bound)
    # trunc_normal_(std=0.02) approximated by a clipped normal (init-only).
    rate_token = jnp.clip(0.02 * jax.random.normal(k_t, (R, embed_dim), jnp.float32),
                          -0.04, 0.04)
    return {"weight": weight, "bias": bias, "rate_token": rate_token}


def _reference(x_nchw, indexes, params):
    """Pure-JAX f32 reference mirroring the PyTorch forward semantics."""
    B, Cin, H, W = x_nchw.shape
    L = H * W
    x_blc = jnp.transpose(x_nchw.reshape(B, Cin, L), (0, 2, 1))        # (B, L, Cin)
    idx = indexes.reshape(B, L)
    w = params["weight"][idx]                                          # (B, L, Cin, C)
    b = params["bias"][idx]                                            # (B, L, C)
    t = params["rate_token"][idx]                                      # (B, L, C)
    y = jnp.einsum("blc,blcd->bld", x_blc, w) + b + t
    C = params["weight"].shape[-1]
    return jnp.transpose(y, (0, 2, 1)).reshape(B, C, H, W)


if __name__ == "__main__":
    # Small shapes consistent with the module:
    #   embed_dim (C) = 32, rate_choice = [0, 8, 16] -> Cin = 16, R = 3
    #   B = 2, H = W = 16 -> L = 256 tokens per image, indexes has B*H*W = 512
    embed_dim = 32
    rate_choice = [0, 8, 16]
    B, H, W = 2, 16, 16
    Cin = max(rate_choice)

    key = jax.random.PRNGKey(0)
    k_p, k_x, k_i = jax.random.split(key, 3)
    params = init_params(k_p, embed_dim, rate_choice)
    x = jax.random.normal(k_x, (B, Cin, H, W), jnp.float32)
    indexes = jax.random.randint(k_i, (B * H * W,), 0, len(rate_choice), jnp.int32)

    fwd = jax.jit(jscc_decoder_forward)
    out = jax.block_until_ready(fwd(x, indexes, params))

    ref = _reference(x, indexes, params)
    assert out.shape == (B, embed_dim, H, W)
    # bf16 MXU operands with f32 accumulation vs a pure-f32 reference.
    err = float(jnp.max(jnp.abs(out - ref)))
    assert jnp.allclose(out, ref, atol=2e-2, rtol=2e-2), err
    print("KERNEL_OK")
</pallas_src>

<mosaic_0001>
module attributes {stable_mosaic.version = 11 : i64} {
  func.func @_jscc_kernel(%arg0: i32, %arg1: i32, %arg2: memref<1x1x256xi32, #tpu.memory_space<vmem>>, %arg3: memref<1x17x256xbf16, #tpu.memory_space<vmem>>, %arg4: memref<96x17xbf16, #tpu.memory_space<vmem>>, %arg5: memref<1x32x256xf32, #tpu.memory_space<vmem>>) attributes {dimension_semantics = [#tpu.dimension_semantics<parallel>, #tpu.dimension_semantics<parallel>], iteration_bounds = array<i64: 2, 1>, scalar_prefetch = 0 : i64, scratch_operands = 0 : i64, tpu.core_type = #tpu.core_type<tc>, window_params = [{transform_indices = @transform_0, window_bounds = array<i64: 1, 1, 256>}, {transform_indices = @transform_1, window_bounds = array<i64: 1, 17, 256>}, {pipeline_mode = #tpu.pipeline_mode<synchronous>, transform_indices = @transform_2, window_bounds = array<i64: 96, 17>}, {transform_indices = @transform_3, window_bounds = array<i64: 1, 32, 256>}]} {
    %c0 = arith.constant 0 : index
    %c0_0 = arith.constant 0 : index
    %c0_1 = arith.constant 0 : index
    %0 = vector.load %arg2[%c0, %c0_0, %c0_1] : memref<1x1x256xi32, #tpu.memory_space<vmem>>, vector<1x1x256xi32>
    %1 = vector.shape_cast %0 : vector<1x1x256xi32> to vector<1x256xi32>
    %c0_2 = arith.constant 0 : index
    %c0_3 = arith.constant 0 : index
    %2 = vector.load %arg4[%c0_2, %c0_3] : memref<96x17xbf16, #tpu.memory_space<vmem>>, vector<96x17xbf16>
    %c0_4 = arith.constant 0 : index
    %c0_5 = arith.constant 0 : index
    %c0_6 = arith.constant 0 : index
    %3 = vector.load %arg3[%c0_4, %c0_5, %c0_6] : memref<1x17x256xbf16, #tpu.memory_space<vmem>>, vector<1x17x256xbf16>
    %4 = vector.shape_cast %3 : vector<1x17x256xbf16> to vector<17x256xbf16>
    %cst = arith.constant dense<0.000000e+00> : vector<96x256xf32>
    %5 = tpu.matmul %2, %4, %cst {dimension_numbers = #tpu.dot_dimension_numbers<[1], [0], [0], [1], [0, 0, 1, 1], [], []>} : vector<96x17xbf16>, vector<17x256xbf16>, vector<96x256xf32> -> vector<96x256xf32>
    %6 = vector.extract_strided_slice %5 {offsets = [0, 0], sizes = [32, 256], strides = [1, 1]} : vector<96x256xf32> to vector<32x256xf32>
    %c1_i32 = arith.constant 1 : i32
    %7 = vector.broadcast %c1_i32 : i32 to vector<1x256xi32>
    %8 = arith.cmpi eq, %1, %7 : vector<1x256xi32>
    %9 = vector.extract_strided_slice %5 {offsets = [32, 0], sizes = [32, 256], strides = [1, 1]} : vector<96x256xf32> to vector<32x256xf32>
    %10 = vector.shape_cast %8 : vector<1x256xi1> to vector<1x256xi1>
    %11 = vector.broadcast %10 : vector<1x256xi1> to vector<32x256xi1>
    %12 = arith.select %11, %9, %6 : vector<32x256xi1>, vector<32x256xf32>
    %c2_i32 = arith.constant 2 : i32
    %13 = vector.broadcast %c2_i32 : i32 to vector<1x256xi32>
    %14 = arith.cmpi eq, %1, %13 : vector<1x256xi32>
    %15 = vector.extract_strided_slice %5 {offsets = [64, 0], sizes = [32, 256], strides = [1, 1]} : vector<96x256xf32> to vector<32x256xf32>
    %16 = vector.shape_cast %14 : vector<1x256xi1> to vector<1x256xi1>
    %17 = vector.broadcast %16 : vector<1x256xi1> to vector<32x256xi1>
    %18 = arith.select %17, %15, %12 : vector<32x256xi1>, vector<32x256xf32>
    %c0_7 = arith.constant 0 : index
    %c0_8 = arith.constant 0 : index
    %c0_9 = arith.constant 0 : index
    %19 = vector.load %arg5[%c0_7, %c0_8, %c0_9] : memref<1x32x256xf32, #tpu.memory_space<vmem>>, vector<1x32x256xf32>
    %20 = vector.shape_cast %19 : vector<1x32x256xf32> to vector<32x256xf32>
    %21 = vector.shape_cast %18 : vector<32x256xf32> to vector<1x32x256xf32>
    tpu.vector_store %arg5[%c0_7, %c0_8, %c0_9], %21 {strides = array<i32>} : memref<1x32x256xf32, #tpu.memory_space<vmem>>, vector<1x32x256xf32>,
    return
  }
  func.func @transform_0(%arg0: i32, %arg1: i32) -> (i32, i32, i32) {
    %c0_i32 = arith.constant 0 : i32
    %c0_i32_0 = arith.constant 0 : i32
    return %arg0, %c0_i32, %arg1 : i32, i32, i32
  }
  func.func @transform_1(%arg0: i32, %arg1: i32) -> (i32, i32, i32) {
    %c0_i32 = arith.constant 0 : i32
    %c0_i32_0 = arith.constant 0 : i32
    return %arg0, %c0_i32, %arg1 : i32, i32, i32
  }
  func.func @transform_2(%arg0: i32, %arg1: i32) -> (i32, i32) {
    %c0_i32 = arith.constant 0 : i32
    %c0_i32_0 = arith.constant 0 : i32
    %c0_i32_1 = arith.constant 0 : i32
    return %c0_i32, %c0_i32_0 : i32, i32
  }
  func.func @transform_3(%arg0: i32, %arg1: i32) -> (i32, i32, i32) {
    %c0_i32 = arith.constant 0 : i32
    %c0_i32_0 = arith.constant 0 : i32
    return %arg0, %c0_i32, %arg1 : i32, i32, i32
  }
}

</mosaic_0001>

<llo_original>
// kernel: jscc_decoder_forward.1
$region0: #{jscc_decoder_forward.1}
  #allocation0 [shape = 'u32[]', space=smem, size = 0x4, offset = 0x4, fixed_abs, tag = 'smem constant byte address 0x4 - core index']
  #allocation1 [shape = 'u32[144,128]{1,0:T(1,128)}', space=vmem, size = 0x12000, scoped, tag = 'internal scratch']
  %s0 = inlined_call_operand.vmem [shape: s32[2,1,256], index: 0, kind: input, shape index: {}]
  %s1 = inlined_call_operand.vmem [shape: bf16[2,17,256], index: 1, kind: input, shape index: {}]
  %s2 = inlined_call_operand.vmem [shape: bf16[96,17], index: 2, kind: input, shape index: {}]
  %s3 = inlined_call_operand.vmem [shape: f32[2,32,256], index: 3, kind: output, shape index: {}]
  %s4 = sld [smem:[#allocation0]]
  $region45: #{jscc_decoder_forward.1} parent=0
    _
  %s6 = ssub.s32 1, %s4
  %s7 = scalar_select 0, %s6, %s4
  loop: start=0, step=1, limit=4
  $region2: #{jscc_decoder_forward.1} parent=0 // loop_pre_header
    _
  $region3: #{jscc_decoder_forward.1} parent=0 // loop_header
    %s9 = sphi 0, %s13
    %p10 = scmp.ge.s32.totalorder %s9, 4
    %s16 = sphi 0, %s28
    %s17 = sphi 0, %s24
    %s18 = sphi 0, %s16
    %s19 = sphi 0, %s17
    %s20 = sphi 0, %s18
    %s21 = sphi 0, %s19
    %s33 = sphi 0, %s35
    %s36 = sphi 0, %s33
    %s37 = sphi 0, %s36
    %s53 = sphi 0, %s37
    %s61 = sphi 0, %s63
    %s64 = sphi 0, %s61
    %s65 = sphi 0, %s64
    %s81 = sphi 0, %s65
    %s85 = sphi 0, %s85
    %s87 = sphi 0, %s85
    %s88 = sphi 0, %s87
    %s102 = sphi 0, %s88
    %s110 = sphi 0, %s112
    %s113 = sphi 0, %s110
    %s114 = sphi 0, %s113
    %s130 = sphi 0, %s114
  $region4: #{jscc_decoder_forward.1} parent=0 // loop_header_branch
    %12 = sbr.rel (%p10) target = $region8
  $region5: #{jscc_decoder_forward.1} parent=0 // loop_body
    %s14 = ssub.s32 %s9, 1
    %s15 = ssub.s32 %s9, 2
    %s22 = sadd.s32 1, %s17
    %p23 = scmp.ge.s32.totalorder %s22, 1
    %s24 = scalar_select %p23, 0, %s22
    %s25 = sadd.s32 1, %s16
    %s26 = scalar_select %p23, %s25, %s16
    %p27 = scmp.ge.s32.totalorder %s26, 2
    %s28 = scalar_select %p27, 0, %s26
    %s29 = ssub.s32 %s16, %s28
    %s30 = ssub.s32 %s17, %s24
    %s31 = sor.u32 %s29, %s30
    %p32 = scmp.eq.s32.totalorder %s31, 0
    %s34 = sadd.s32 %s33, 1
    %s35 = scalar_select %p32, %s33, %s34
    %p38 = pneg %p32
    %p39 = scmp.eq.s32.totalorder %s9, 1
    %p40 = por %p38, %p39
    %p41 = scmp.ne.s32.totalorder %s33, %s36
    %p42 = scmp.eq.s32.totalorder %s9, 0
    %p43 = por %p41, %p42
    %p44 = scmp.ne.s32.totalorder %s33, %s36
    %p45 = scmp.eq.s32.totalorder %s14, 1
    %p46 = por %p44, %p45
    %p47 = scmp.ne.s32.totalorder %s36, %s37
    %p48 = scmp.eq.s32.totalorder %s14, 0
    %p49 = por %p47, %p48
    %p50 = scmp.ne.s32.totalorder %s36, %s37
    %p51 = scmp.eq.s32.totalorder %s15, 1
    %p52 = por %p50, %p51
    %p54 = scmp.ne.s32.totalorder %s37, %s53
    %p55 = scmp.eq.s32.totalorder %s15, 0
    %p56 = por %p54, %p55
    %s57 = ssub.s32 %s16, %s28
    %s58 = ssub.s32 %s17, %s24
    %s59 = sor.u32 %s57, %s58
    %p60 = scmp.eq.s32.totalorder %s59, 0
    %s62 = sadd.s32 %s61, 1
    %s63 = scalar_select %p60, %s61, %s62
    %p66 = pneg %p60
    %p67 = scmp.eq.s32.totalorder %s9, 1
    %p68 = por %p66, %p67
    %p69 = scmp.ne.s32.totalorder %s61, %s64
    %p70 = scmp.eq.s32.totalorder %s9, 0
    %p71 = por %p69, %p70
    %p72 = scmp.ne.s32.totalorder %s61, %s64
    %p73 = scmp.eq.s32.totalorder %s14, 1
    %p74 = por %p72, %p73
    %p75 = scmp.ne.s32.totalorder %s64, %s65
    %p76 = scmp.eq.s32.totalorder %s14, 0
    %p77 = por %p75, %p76
    %p78 = scmp.ne.s32.totalorder %s64, %s65
    %p79 = scmp.eq.s32.totalorder %s15, 1
    %p80 = por %p78, %p79
    %p82 = scmp.ne.s32.totalorder %s65, %s81
    %p83 = scmp.eq.s32.totalorder %s15, 0
    %p84 = por %p82, %p83
    %s86 = sadd.s32 %s85, 1
    %p89 = scmp.eq.s32.totalorder %s9, 1
    %p90 = scmp.ne.s32.totalorder %s85, %s87
    %p91 = scmp.eq.s32.totalorder %s9, 0
    %p92 = por %p90, %p91
    %p93 = scmp.ne.s32.totalorder %s85, %s87
    %p94 = scmp.eq.s32.totalorder %s14, 1
    %p95 = por %p93, %p94
    %p96 = scmp.ne.s32.totalorder %s87, %s88
    %p97 = scmp.eq.s32.totalorder %s14, 0
    %p98 = por %p96, %p97
    %p99 = scmp.ne.s32.totalorder %s87, %s88
    %p100 = scmp.eq.s32.totalorder %s15, 1
    %p101 = por %p99, %p100
    %p103 = scmp.ne.s32.totalorder %s88, %s102
    %p104 = scmp.eq.s32.totalorder %s15, 0
    %p105 = por %p103, %p104
    %s106 = ssub.s32 %s16, %s28
    %s107 = ssub.s32 %s17, %s24
    %s108 = sor.u32 %s106, %s107
    %p109 = scmp.eq.s32.totalorder %s108, 0
    %s111 = sadd.s32 %s110, 1
    %s112 = scalar_select %p109, %s110, %s111
    %p115 = pneg %p109
    %p116 = scmp.eq.s32.totalorder %s9, 1
    %p117 = por %p115, %p116
    %p118 = scmp.ne.s32.totalorder %s110, %s113
    %p119 = scmp.eq.s32.totalorder %s9, 0
    %p120 = por %p118, %p119
    %p121 = scmp.ne.s32.totalorder %s110, %s113
    %p122 = scmp.eq.s32.totalorder %s14, 1
    %p123 = por %p121, %p122
    %p124 = scmp.ne.s32.totalorder %s113, %s114
    %p125 = scmp.eq.s32.totalorder %s14, 0
    %p126 = por %p124, %p125
    %p127 = scmp.ne.s32.totalorder %s113, %s114
    %p128 = scmp.eq.s32.totalorder %s15, 1
    %p129 = por %p127, %p128
    %p131 = scmp.ne.s32.totalorder %s114, %s130
    %p132 = scmp.eq.s32.totalorder %s15, 0
    %p133 = por %p131, %p132
    %p134 = scmp.le.s32.totalorder 1, %s9
    %p135 = scmp.lt.s32.totalorder %s9, 3
    %p136 = pnand %p134, %p135
    %p137 = pneg %p136
    // Predicated region
    $region9: #{jscc_decoder_forward.1} parent=5 // pred_check
      _
    $region10: #{jscc_decoder_forward.1} parent=5 // pred_check_branch
      %139 = sbr.rel (%p136) target = $region12
    $region11: #{jscc_decoder_forward.1} parent=5 // pred_region
      %s140 = ssub.s32 %s9, 1
      // Predicated region
      $region13: #{jscc_decoder_forward.1} parent=11 // pred_check
        %p141 = pneg %p98
      $region14: #{jscc_decoder_forward.1} parent=11 // pred_check_branch
        %143 = sbr.rel (%p141) target = $region16
      $region15: #{jscc_decoder_forward.1} parent=11 // pred_region
        _
      $region16: #{jscc_decoder_forward.1} parent=11 // pred_fallthru
        _
    $region12: #{jscc_decoder_forward.1} parent=5 // pred_fallthru
      _
    %p144 = scmp.lt.s32.totalorder %s9, 2
    // Predicated region
    $region17: #{jscc_decoder_forward.1} parent=5 // pred_check
      %p145 = pneg %p144
    $region18: #{jscc_decoder_forward.1} parent=5 // pred_check_branch
      %147 = sbr.rel (%p145) target = $region20
    $region19: #{jscc_decoder_forward.1} parent=5 // pred_region
      // Predicated region
      $region21: #{jscc_decoder_forward.1} parent=19 // pred_check
        %p148 = pneg %p43
      $region22: #{jscc_decoder_forward.1} parent=19 // pred_check_branch
        %150 = sbr.rel (%p148) target = $region24
      $region23: #{jscc_decoder_forward.1} parent=19 // pred_region
        %s151 = smul.u32 2, %s17
        %p152 = scmp.lt.s32.totalorder %s16, 1
        %s153 = scalar_select %p152, %s16, 1
        %p154 = scmp.lt.s32.totalorder %s151, 1
        %s155 = scalar_select %p154, %s151, 1
        %s156 = smul.addr %s153, 2
        %s157 = sadd.s32 %s155, %s156
        %s158 = scalar_lea.vmem %s0, %s157
        %s159 = smul.u32 2, %s17
      $region24: #{jscc_decoder_forward.1} parent=19 // pred_fallthru
        _
      // Predicated region
      $region25: #{jscc_decoder_forward.1} parent=19 // pred_check
        %p160 = pneg %p71
      $region26: #{jscc_decoder_forward.1} parent=19 // pred_check_branch
        %162 = sbr.rel (%p160) target = $region28
      $region27: #{jscc_decoder_forward.1} parent=19 // pred_region
        %s163 = smul.u32 2, %s17
        %p164 = scmp.lt.s32.totalorder %s16, 1
        %s165 = scalar_select %p164, %s16, 1
        %p166 = scmp.lt.s32.totalorder %s163, 1
        %s167 = scalar_select %p166, %s163, 1
        %s168 = smul.addr %s165, 6
        %s169 = sadd.s32 %s167, %s168
        %s170 = smul.addr %s169, 4
        %s171 = scalar_lea.vmem %s1, %s170
        %s172 = smul.u32 2, %s17
      $region28: #{jscc_decoder_forward.1} parent=19 // pred_fallthru
        _
    $region20: #{jscc_decoder_forward.1} parent=5 // pred_fallthru
      _
    %p173 = scmp.le.s32.totalorder 1, %s9
    %p174 = scmp.lt.s32.totalorder %s9, 3
    %p175 = pnand %p173, %p174
    %p176 = pneg %p175
    // Predicated region
    $region29: #{jscc_decoder_forward.1} parent=5 // pred_check
      _
    $region30: #{jscc_decoder_forward.1} parent=5 // pred_check_branch
      %178 = sbr.rel (%p175) target = $region32
    $region31: #{jscc_decoder_forward.1} parent=5 // pred_region
      %s179 = ssub.s32 %s9, 1
      %s180 = smul.u32 2, %s19
      %p181 = scmp.lt.s32.totalorder %s18, 1
      %s182 = scalar_select %p181, %s18, 1
      %p183 = scmp.lt.s32.totalorder %s180, 1
      %s184 = scalar_select %p183, %s180, 1
      %s185 = smul.addr %s182, 2
      %s186 = sadd.s32 %s184, %s185
      %s187 = scalar_lea.vmem %s0, %s186
      %p188 = pneg %p49
      %p189 = pneg %p46
      %s190 = smul.u32 2, %s19
      %p191 = scmp.lt.s32.totalorder %s18, 1
      %s192 = scalar_select %p191, %s18, 1
      %p193 = scmp.lt.s32.totalorder %s190, 1
      %s194 = scalar_select %p193, %s190, 1
      %s195 = smul.addr %s192, 6
      %s196 = sadd.s32 %s194, %s195
      %s197 = smul.addr %s196, 4
      %s198 = scalar_lea.vmem %s1, %s197
      %p199 = pneg %p77
      %p200 = pneg %p74
      %p201 = pneg %p98
      %p202 = pneg %p95
      %p203 = pneg %p126
      %p204 = pneg %p123
      %s205 = smul.u32 2, %s19
      %p206 = scmp.lt.s32.totalorder %s18, 1
      %s207 = scalar_select %p206, %s18, 1
      %p208 = scmp.lt.s32.totalorder %s205, 1
      %s209 = scalar_select %p208, %s205, 1
      %s210 = smul.addr %s207, 8
      %s211 = sadd.s32 %s209, %s210
      %s212 = smul.addr %s211, 8
      %s213 = scalar_lea.vmem %s3, %s212
      %s214 = smul.u32 2, %s19
      %p215 = scmp.lt.s32.totalorder %s18, 1
      %s216 = scalar_select %p215, %s18, 1
      %p217 = scmp.lt.s32.totalorder %s214, 1
      %s218 = scalar_select %p217, %s214, 1
      %s219 = smul.addr %s216, 2
      %s220 = sadd.s32 %s218, %s219
      %s221 = scalar_lea.vmem %s0, %s220
      %s222 = smul.u32 2, %s19
      %s223 = smul.u32 2, %s19
      %p224 = scmp.lt.s32.totalorder %s18, 1
      %s225 = scalar_select %p224, %s18, 1
      %p226 = scmp.lt.s32.totalorder %s223, 1
      %s227 = scalar_select %p226, %s223, 1
      %s228 = smul.addr %s225, 6
      %s229 = sadd.s32 %s227, %s228
      %s230 = smul.addr %s229, 4
      %s231 = scalar_lea.vmem %s1, %s230
      %s232 = smul.u32 2, %s19
      %s233 = smul.u32 2, %s19
      %p234 = scmp.lt.s32.totalorder %s18, 1
      %s235 = scalar_select %p234, %s18, 1
      %p236 = scmp.lt.s32.totalorder %s233, 1
      %s237 = scalar_select %p236, %s233, 1
      %s238 = smul.addr %s235, 8
      %s239 = sadd.s32 %s237, %s238
      %s240 = smul.addr %s239, 8
      %s241 = scalar_lea.vmem %s3, %s240
      %s242 = smul.u32 2, %s19
      %v244 = vld [vmem:[%s221] sm:$0x3]
      %v245 = vld [vmem:[%s2] sm:$0xf]
      %v246 = vld [vmem:[%s2 + $0x4] sm:$0xf]
      %v247 = vld [vmem:[%s2 + $0x8] sm:$0xf]
      %v248 = vld [vmem:[%s2 + $0xc] sm:$0xf]
      %v249 = vld [vmem:[%s2 + $0x10] sm:$0xf]
      %v250 = vld [vmem:[%s2 + $0x14] sm:$0xf]
      %v251 = vld [vmem:[%s2 + $0x18] sm:$0xf]
      %v252 = vld [vmem:[%s2 + $0x1c] sm:$0xf]
      %v253 = vld [vmem:[%s2 + $0x20] sm:$0xf]
      %v254 = vld [vmem:[%s2 + $0x24] sm:$0xf]
      %v255 = vld [vmem:[%s2 + $0x28] sm:$0xf]
      %v256 = vld [vmem:[%s2 + $0x2c] sm:$0xf]
      %v257 = vld [vmem:[%s231] sm:$0xff]
      %v258 = vld [vmem:[%s231 + $0x8] sm:$0xff]
      %v259 = vld [vmem:[%s231 + $0x10] sm:$0x11]
      %v272 = vunpack.c.l.b16 %v245
      %v273 = vunpack.c.l.b16 %v246
      %v274 = vunpack.c.l.b16 %v247
      %v275 = vunpack.c.l.b16 %v248
      %v276 = vunpack.c.l.b16 %v249
      %v277 = vunpack.c.l.b16 %v250
      %v278 = vunpack.c.l.b16 %v251
      %v279 = vunpack.c.l.b16 %v252
      %v280 = vunpack.c.l.b16 %v253
      %v281 = vunpack.c.l.b16 %v254
      %v282 = vunpack.c.l.b16 %v255
      %v283 = vunpack.c.l.b16 %v256
      %v284 = vpack.c.b16 %v273, %v272
      %v285 = vpack.c.b16 %v275, %v274
      %v286 = vpack.c.b16 %v277, %v276
      %v287 = vpack.c.b16 %v279, %v278
      %v288 = vpack.c.b16 %v281, %v280
      %v289 = vpack.c.b16 %v283, %v282
      %v293 = vunpack.c.l.b16 %v257
      %v294 = vunpack.c.h.b16 %v257
      %v295 = vunpack.c.l.b16 %v258
      %v296 = vunpack.c.h.b16 %v258
      %v297 = vunpack.c.l.b16 %v259
      %v298 = vunpack.c.h.b16 %v259
      %v299 = vpack.c.b16 %v295, %v293
      %v300 = vpack.c.b16 %v296, %v294
      %v301 = vpack.c.b16 %v297, %v297
      %v302 = vpack.c.b16 %v298, %v298
      %vm305 = vcmask 138240
      %v307 = vsel %vm305, %v284, 0
      %v310 = vsel %vm305, %v285, 0
      %v313 = vsel %vm305, %v286, 0
      %v316 = vsel %vm305, %v287, 0
      %v319 = vsel %vm305, %v288, 0
      %v322 = vsel %vm305, %v289, 0
      %vm324 = vcmask 1040384
      %v325 = vsel 0, 4294967295, 65535
      %v326 = vsel %vm324, %v325, 0
      %v328 = vand.u32 %v301, %v326
      %v331 = vand.u32 %v302, %v326
      %333 = vmatprep.subr.bf16.mxu0 %v300
      %334 = vmatpush1.bf16.msra.mxu0 %v299
      %335 = vmatprep.subr.bf16.mxu0 %v331
      %336 = vmatpush1.bf16.msra.mxu0 %v328
      %337 = vmatprep.subr.bf16.mxu0 0
      %338 = vmatpush1.bf16.msra.mxu0 0
      %339 = vmatprep.subr.bf16.mxu0 0
      %340 = vmatpush1.bf16.msra.mxu0 0
      %341 = vmatprep.subr.bf16.mxu0 0
      %342 = vmatpush1.bf16.msra.mxu0 0
      %343 = vmatprep.subr.bf16.mxu0 0
      %344 = vmatpush1.bf16.msra.mxu0 0
      %345 = vmatprep.subr.bf16.mxu0 0
      %346 = vmatpush1.bf16.msra.mxu0 0
      %347 = vmatprep.subr.bf16.mxu0 0
      %348 = vmatpush1.bf16.msra.mxu0 0
      %349 = vmatprep.subr.bf16.mxu0 0
      %350 = vmatpush1.bf16.msra.mxu0 0
      %351 = vmatprep.subr.bf16.mxu0 0
      %352 = vmatpush1.bf16.msra.mxu0 0
      %353 = vmatprep.subr.bf16.mxu0 0
      %354 = vmatpush1.bf16.msra.mxu0 0
      %355 = vmatprep.subr.bf16.mxu0 0
      %356 = vmatpush1.bf16.msra.mxu0 0
      %357 = vmatprep.subr.bf16.mxu0 0
      %358 = vmatpush1.bf16.msra.mxu0 0
      %359 = vmatprep.subr.bf16.mxu0 0
      %360 = vmatpush1.bf16.msra.mxu0 0
      %361 = vmatprep.subr.bf16.mxu0 0
      %362 = vmatpush1.bf16.msra.mxu0 0
      %363 = vmatprep.subr.bf16.mxu0 0
      %364 = vmatpush1.bf16.msra.mxu0 0
      %365 = vmatprep.mubr.bf16.mxu0 0
      %366 = vmatmul.mubr.bf16.gmra.mrb[0].mxu0 %v307
      %v367 = vpop.f32.mrb[0].mxu0
      %v368 = vadd.f32 0.0, %v367
      %v369 = vpop.f32.mrb[0].mxu0
      %v370 = vadd.f32 0.0, %v369
      %v371 = vpop.f32.mrb[0].mxu0
      %v372 = vadd.f32 0.0, %v371
      %v373 = vpop.f32.mrb[0].mxu0
      %v374 = vadd.f32 0.0, %v373
      %375 = vmatprep.mubr.bf16.mxu0 0
      %376 = vmatmul.mubr.bf16.gmra.mrb[0].mxu0 %v310
      %v377 = vpop.f32.mrb[0].mxu0
      %v378 = vadd.f32 0.0, %v377
      %v379 = vpop.f32.mrb[0].mxu0
      %v380 = vadd.f32 0.0, %v379
      %v381 = vpop.f32.mrb[0].mxu0
      %v382 = vadd.f32 0.0, %v381
      %v383 = vpop.f32.mrb[0].mxu0
      %v384 = vadd.f32 0.0, %v383
      %385 = vmatprep.mubr.bf16.mxu0 0
      %386 = vmatmul.mubr.bf16.gmra.mrb[0].mxu0 %v313
      %v387 = vpop.f32.mrb[0].mxu0
      %v388 = vadd.f32 0.0, %v387
      %v389 = vpop.f32.mrb[0].mxu0
      %v390 = vadd.f32 0.0, %v389
      %v391 = vpop.f32.mrb[0].mxu0
      %v392 = vadd.f32 0.0, %v391
      %v393 = vpop.f32.mrb[0].mxu0
      %v394 = vadd.f32 0.0, %v393
      %395 = vmatprep.mubr.bf16.mxu0 0
      %396 = vmatmul.mubr.bf16.gmra.mrb[0].mxu0 %v316
      %v397 = vpop.f32.mrb[0].mxu0
      %v398 = vadd.f32 0.0, %v397
      %v399 = vpop.f32.mrb[0].mxu0
      %v400 = vadd.f32 0.0, %v399
      %v401 = vpop.f32.mrb[0].mxu0
      %v402 = vadd.f32 0.0, %v401
      %v403 = vpop.f32.mrb[0].mxu0
      %v404 = vadd.f32 0.0, %v403
      %405 = vmatprep.mubr.bf16.mxu0 0
      %406 = vmatmul.mubr.bf16.gmra.mrb[0].mxu0 %v319
      %v407 = vpop.f32.mrb[0].mxu0
      %v408 = vadd.f32 0.0, %v407
      %v409 = vpop.f32.mrb[0].mxu0
      %v410 = vadd.f32 0.0, %v409
      %v411 = vpop.f32.mrb[0].mxu0
      %v412 = vadd.f32 0.0, %v411
      %v413 = vpop.f32.mrb[0].mxu0
      %v414 = vadd.f32 0.0, %v413
      %415 = vmatprep.mubr.bf16.mxu0 0
      %416 = vmatmul.mubr.bf16.gmra.mrb[0].mxu0 %v322
      %v417 = vpop.f32.mrb[0].mxu0
      %v418 = vadd.f32 0.0, %v417
      %v419 = vpop.f32.mrb[0].mxu0
      %v420 = vadd.f32 0.0, %v419
      %v421 = vpop.f32.mrb[0].mxu0
      %v422 = vadd.f32 0.0, %v421
      %v423 = vpop.f32.mrb[0].mxu0
      %v424 = vadd.f32 0.0, %v423
      %425 = vdwg.mxu0
      %vm426 = vcmp.eq.s32.totalorder %v244, 1
      %v427 = vsel %vm426, 1, 0
      %v428 = vlaneseq
      %v429 = vshrl.u32 %v428, 7
      %v430 = vsub.s32 0, %v429
      %v431 = vrot.slane %v427, %v430
      %v432 = vlaneseq
      %v433 = vshrl.u32 %v432, 7
      %v434 = vsub.s32 1, %v433
      %v435 = vrot.slane %v427, %v434
      %vm436 = vcmp.eq.s32.totalorder %v431, 1
      %vm437 = vcmp.eq.s32.totalorder %v435, 1
      %v438 = vsel %vm436, %v388, %v368
      %v439 = vsel %vm437, %v390, %v370
      %v440 = vsel %vm436, %v392, %v372
      %v441 = vsel %vm437, %v394, %v374
      %v442 = vsel %vm436, %v398, %v378
      %v443 = vsel %vm437, %v400, %v380
      %v444 = vsel %vm436, %v402, %v382
      %v445 = vsel %vm437, %v404, %v384
      %vm446 = vcmp.eq.s32.totalorder %v244, 2
      %v447 = vsel %vm446, 1, 0
      %v448 = vlaneseq
      %v449 = vshrl.u32 %v448, 7
      %v450 = vsub.s32 0, %v449
      %v451 = vrot.slane %v447, %v450
      %v452 = vlaneseq
      %v453 = vshrl.u32 %v452, 7
      %v454 = vsub.s32 1, %v453
      %v455 = vrot.slane %v447, %v454
      %vm456 = vcmp.eq.s32.totalorder %v451, 1
      %vm457 = vcmp.eq.s32.totalorder %v455, 1
      %v458 = vsel %vm456, %v408, %v438
      %v459 = vsel %vm457, %v410, %v439
      %v460 = vsel %vm456, %v412, %v440
      %v461 = vsel %vm457, %v414, %v441
      %v462 = vsel %vm456, %v418, %v442
      %v463 = vsel %vm457, %v420, %v443
      %v464 = vsel %vm456, %v422, %v444
      %v465 = vsel %vm457, %v424, %v445
      %466 = vst [vmem:[%s241] sm:$0xff] %v458
      %467 = vst [vmem:[%s241 + $0x8] sm:$0xff] %v459
      %468 = vst [vmem:[%s241 + $0x10] sm:$0xff] %v460
      %469 = vst [vmem:[%s241 + $0x18] sm:$0xff] %v461
      %470 = vst [vmem:[%s241 + $0x20] sm:$0xff] %v462
      %471 = vst [vmem:[%s241 + $0x28] sm:$0xff] %v463
      %472 = vst [vmem:[%s241 + $0x30] sm:$0xff] %v464
      %473 = vst [vmem:[%s241 + $0x38] sm:$0xff] %v465
      %s474 = smul.u32 2, %s19
      %p475 = scmp.lt.s32.totalorder %s18, 1
      %s476 = scalar_select %p475, %s18, 1
      %p477 = scmp.lt.s32.totalorder %s474, 1
      %s478 = scalar_select %p477, %s474, 1
      %s479 = smul.addr %s476, 8
      %s480 = sadd.s32 %s478, %s479
      %s481 = smul.addr %s480, 8
      %s482 = scalar_lea.vmem %s3, %s481
      // Predicated region
      $region33: #{jscc_decoder_forward.1} parent=31 // pred_check
        %p483 = pneg %p123
      $region34: #{jscc_decoder_forward.1} parent=31 // pred_check_branch
        %485 = sbr.rel (%p483) target = $region36
      $region35: #{jscc_decoder_forward.1} parent=31 // pred_region
        %s486 = smul.u32 2, %s19
      $region36: #{jscc_decoder_forward.1} parent=31 // pred_fallthru
        _
    $region32: #{jscc_decoder_forward.1} parent=5 // pred_fallthru
      _
    %p487 = scmp.le.s32.totalorder 2, %s9
    // Predicated region
    $region37: #{jscc_decoder_forward.1} parent=5 // pred_check
      %p488 = pneg %p487
    $region38: #{jscc_decoder_forward.1} parent=5 // pred_check_branch
      %490 = sbr.rel (%p488) target = $region40
    $region39: #{jscc_decoder_forward.1} parent=5 // pred_region
      %s491 = ssub.s32 %s9, 2
      // Predicated region
      $region41: #{jscc_decoder_forward.1} parent=39 // pred_check
        %p492 = pneg %p129
      $region42: #{jscc_decoder_forward.1} parent=39 // pred_check_branch
        %494 = sbr.rel (%p492) target = $region44
      $region43: #{jscc_decoder_forward.1} parent=39 // pred_region
        %s495 = smul.u32 2, %s21
        %p496 = scmp.lt.s32.totalorder %s20, 1
        %s497 = scalar_select %p496, %s20, 1
        %p498 = scmp.lt.s32.totalorder %s495, 1
        %s499 = scalar_select %p498, %s495, 1
        %s500 = smul.addr %s497, 8
        %s501 = sadd.s32 %s499, %s500
        %s502 = smul.addr %s501, 8
        %s503 = scalar_lea.vmem %s3, %s502
      $region44: #{jscc_decoder_forward.1} parent=39 // pred_fallthru
        _
    $region40: #{jscc_decoder_forward.1} parent=5 // pred_fallthru
      _
  $region6: #{jscc_decoder_forward.1} parent=0 // loop_footer
    %s13 = sadd.s32 1, %s9
  $region7: #{jscc_decoder_forward.1} parent=0 // loop_footer_branch
    %8 = sbr.rel target = $region3
  $region8: #{jscc_decoder_forward.1} parent=0 // loop_exit
    _

</llo_original>
